<compile_context>
chip_gen: v7x
topology: tpu7x:2x2x1
jax: 0.10.0
libtpu: 0.0.40
codegen_flags: <defaults>
</compile_context>

<pallas_src>
import functools

import jax
import jax.numpy as jnp
from jax.experimental import pallas as pl
from jax.experimental.pallas import tpu as pltpu


# ----------------------- hardware-aware configuration -----------------------


def _round_down(v, m):
    return (v // m) * m


def _hw_defaults():
    """Return (core_splits, target_block_bytes, vmem_limit_bytes) for this TPU."""
    kind = ""
    try:
        kind = jax.devices()[0].device_kind.lower()
    except Exception:
        pass
    # Chips with 2 TensorCores per Pallas device (megacore): v7x (also v4 / v5p).
    two_tc = ("v7" in kind) or ("v4" in kind) or ("v5p" in kind)
    n_cores = 2 if two_tc else 1

    vmem_cap = None
    try:
        get_info = getattr(pltpu, "get_tpu_info", None)
        if get_info is not None:
            vmem_cap = int(getattr(get_info(), "vmem_capacity_bytes", 0)) or None
    except Exception:
        vmem_cap = None
    if vmem_cap is None:
        vmem_cap = (64 if "v7" in kind else 128) * 1024 * 1024

    # Raise the scoped VMEM limit toward physical, with headroom for the compiler.
    vmem_limit = max(32 * 1024 * 1024, min(int(vmem_cap * 0.7), 96 * 1024 * 1024))
    # 2 inputs x 2 pipeline buffers per block -> keep 4*block well under the limit.
    target_block_bytes = max(2 * 1024 * 1024, vmem_limit // 10)
    return n_cores, target_block_bytes, vmem_limit


# --------------------------- Pallas loss kernel -----------------------------


def _losses_kernel(x_ref, y_ref, acc_ref, *, block_rows, acc_rows, rows_per_ch,
                   blocks_per_core, total_blocks, tail_ragged, needs_clamp):
    """Accumulate sum((y-x)^2), sum(y^2), sum(|log y - log x|) per (core, channel).

    acc_ref is this (core, channel)'s (3, acc_rows, lanes) output block; it stays
    resident in VMEM across the innermost ("arbitrary") grid axis and acts as a
    vreg-shaped accumulator. The block is processed in 8-row chunks via a
    fori_loop whose carry (3 x (acc_rows, lanes) f32) stays in vregs, so no
    block-sized temporaries are materialized and acc_ref is RMW'd once per block.
    """
    core = pl.program_id(0)
    i = pl.program_id(2)

    @pl.when(i == 0)
    def _init():
        acc_ref[...] = jnp.zeros_like(acc_ref)

    vb = core * blocks_per_core + i          # virtual row-block within this channel
    n_chunks = block_rows // acc_rows        # static
    lanes = x_ref.shape[-1]                  # static (128-multiple or full small C)

    def chunk_stats(off, mask_rows):
        x = x_ref[pl.ds(off, acc_rows), :].astype(jnp.float32)
        y = y_ref[pl.ds(off, acc_rows), :].astype(jnp.float32)
        d = y - x
        dd = d * d
        yy = y * y
        l1 = jnp.abs(jnp.log(y) - jnp.log(x))
        if mask_rows:
            # Rows past the true per-channel row count (ragged tail block only).
            row = jax.lax.broadcasted_iota(jnp.int32, (acc_rows, 1), 0)
            valid = (vb * block_rows + off + row) < rows_per_ch
            zero = jnp.zeros_like(dd)
            dd = jnp.where(valid, dd, zero)
            yy = jnp.where(valid, yy, zero)
            l1 = jnp.where(valid, l1, zero)
        return dd, yy, l1

    def accumulate(mask_rows):
        if n_chunks == 1:
            dd, yy, l1 = chunk_stats(0, mask_rows)
        else:
            def body(j, carry):
                a_dd, a_yy, a_l1 = carry
                off = pl.multiple_of(j * acc_rows, acc_rows)
                dd, yy, l1 = chunk_stats(off, mask_rows)
                return (a_dd + dd, a_yy + yy, a_l1 + l1)

            zero = jnp.zeros((acc_rows, lanes), jnp.float32)
            dd, yy, l1 = jax.lax.fori_loop(0, n_chunks, body, (zero, zero, zero))
        acc_ref[0] += dd
        acc_ref[1] += yy
        acc_ref[2] += l1

    if (not tail_ragged) and (not needs_clamp):
        accumulate(False)
    elif tail_ragged:
        # Only the single ragged tail block pays the jnp.where masks; clamped
        # duplicate virtual blocks (vb >= total_blocks) skip compute entirely.
        @pl.when(vb == total_blocks - 1)
        def _tail():
            accumulate(True)

        @pl.when(vb < total_blocks - 1)
        def _full():
            accumulate(False)
    else:
        # No ragged tail, but the core split over-covers: skip duplicates.
        @pl.when(vb < total_blocks)
        def _full():
            accumulate(False)


def _stft_magnitude_losses(x3, y3, *, n_cores=None, target_block_bytes=None,
                           vmem_limit_bytes=None):
    """Fused SpectralConvergence + LogSTFTMagnitude losses over all channels.

    x3, y3: (CH, rows, C) magnitude slabs (rows = B * #frames, channel-major).
    Returns (sc_loss, mag_loss) float32 scalars (summed over channels).
    """
    assert x3.shape == y3.shape, "x_mag / y_mag shape mismatch"
    CH, rows, C = x3.shape

    hw_cores, hw_tbb, hw_vmem = _hw_defaults()
    if n_cores is None:
        n_cores = hw_cores
    if target_block_bytes is None:
        target_block_bytes = hw_tbb
    if vmem_limit_bytes is None:
        vmem_limit_bytes = hw_vmem

    # Lane-dense kernel width: largest 128-multiple <= C (or full C if C < 128);
    # the small remainder (e.g. the Nyquist bin for C = fft//2+1) is reduced in JAX.
    C_block = C if C < 128 else _round_down(C, 128)
    rem = C - C_block
    lanes = max(128, ((C_block + 127) // 128) * 128)

    # Large row blocks (~target_block_bytes per input per step).
    if rows >= 8:
        by_bytes = _round_down(max(8, target_block_bytes // (lanes * 4)), 8)
        block_rows = max(8, min(by_bytes, _round_down(rows, 8)))
    else:
        block_rows = rows
    acc_rows = 8 if (block_rows >= 8 and block_rows % 8 == 0) else block_rows

    total_blocks = -(-rows // block_rows)
    n_cores = max(1, min(int(n_cores), total_blocks))
    blocks_per_core = -(-total_blocks // n_cores)
    needs_clamp = (n_cores * blocks_per_core != total_blocks)
    tail_ragged = (rows % block_rows) != 0

    if needs_clamp:
        def in_index(c, ch, i):
            vb = c * blocks_per_core + i
            return (ch, jnp.minimum(vb, total_blocks - 1), 0)
    else:
        def in_index(c, ch, i):
            return (ch, c * blocks_per_core + i, 0)

    kernel = functools.partial(
        _losses_kernel,
        block_rows=block_rows, acc_rows=acc_rows, rows_per_ch=rows,
        blocks_per_core=blocks_per_core, total_blocks=total_blocks,
        tail_ragged=tail_ragged, needs_clamp=needs_clamp)

    partials = pl.pallas_call(
        kernel,
        out_shape=jax.ShapeDtypeStruct((n_cores, CH, 3, acc_rows, C_block),
                                       jnp.float32),
        grid_spec=pltpu.PrefetchScalarGridSpec(
            num_scalar_prefetch=0,
            grid=(n_cores, CH, blocks_per_core),
            in_specs=[
                pl.BlockSpec((None, block_rows, C_block), in_index),
                pl.BlockSpec((None, block_rows, C_block), in_index),
            ],
            out_specs=pl.BlockSpec((None, None, 3, acc_rows, C_block),
                                   lambda c, ch, i: (c, ch, 0, 0, 0)),
        ),
        compiler_params=pltpu.CompilerParams(
            dimension_semantics=("parallel", "arbitrary", "arbitrary"),
            vmem_limit_bytes=int(vmem_limit_bytes),
        ),
    )(x3, y3)

    sums = jnp.sum(partials, axis=(0, 3, 4))        # (CH, 3): num, den, l1-sum

    if rem > 0:
        # Tiny remainder columns (e.g. the single Nyquist bin): reduce in JAX so the
        # kernel never pays 640-lane padding; HBM traffic for this is ~rem/C of total.
        xr = x3[..., C_block:].astype(jnp.float32)
        yr = y3[..., C_block:].astype(jnp.float32)
        dr = yr - xr
        rem_sums = jnp.stack(
            [jnp.sum(dr * dr, axis=(1, 2)),
             jnp.sum(yr * yr, axis=(1, 2)),
             jnp.sum(jnp.abs(jnp.log(yr) - jnp.log(xr)), axis=(1, 2))], axis=-1)
        sums = sums + rem_sums

    sc_loss = jnp.sum(jnp.sqrt(sums[:, 0]) / jnp.sqrt(sums[:, 1]))
    mag_loss = jnp.sum(sums[:, 2]) / (rows * C)
    return sc_loss, mag_loss


# ------------------------------- STFT (JAX) ---------------------------------
# TODO(synk): torch.stft's FFT has no Pallas TPU primitive; the magnitude
# spectrograms are computed with jnp (XLA FFT). Only the loss reductions run in
# the Pallas kernel above. A future version should compute windowed-DFT
# magnitudes inside the kernel as an MXU matmul to avoid the HBM round trips.


def _hann_window(win_length, dtype=jnp.float32):
    n = jnp.arange(win_length, dtype=dtype)
    return 0.5 - 0.5 * jnp.cos(2.0 * jnp.pi * n / win_length)   # periodic hann


def _stft_magnitude(x, fft_size, hop_size, win_length, window):
    """|STFT| matching torch.stft defaults (center=True, reflect pad, onesided)
    plus auraloss's sqrt(clamp(.., 1e-7)). x: (B, T) -> (B, n_frames, fft//2+1)."""
    pad = fft_size // 2
    xp = jnp.pad(x, ((0, 0), (pad, pad)), mode="reflect")
    n_frames = 1 + (xp.shape[-1] - fft_size) // hop_size
    idx = (jnp.arange(n_frames) * hop_size)[:, None] + jnp.arange(fft_size)[None, :]
    frames = xp[:, idx]                                    # (B, n_frames, fft_size)
    lpad = (fft_size - win_length) // 2
    win = jnp.zeros((fft_size,), xp.dtype).at[lpad:lpad + win_length].set(window)
    spec = jnp.fft.rfft(frames * win[None, None, :], axis=-1)
    power = jnp.real(spec) ** 2 + jnp.imag(spec) ** 2
    return jnp.sqrt(jnp.maximum(power, 1e-7))


def stft_loss(x, y, *, fft_size=1024, shift_size=120, win_length=600,
              n_cores=None, target_block_bytes=None, vmem_limit_bytes=None):
    """STFTLoss.forward: x, y are (B, C, T); returns (sc_loss, mag_loss)."""
    assert x.shape == y.shape, "x / y shape mismatch"
    B, CH, T = x.shape
    window = _hann_window(win_length, jnp.float32)

    # Channel-major flatten so each channel's magnitude rows form one contiguous
    # slab; the STFT front-end is batched over all (channel, batch) signals at once.
    x2 = jnp.transpose(x, (1, 0, 2)).reshape(CH * B, T)
    y2 = jnp.transpose(y, (1, 0, 2)).reshape(CH * B, T)
    x_mag = _stft_magnitude(x2, fft_size, shift_size, win_length, window)
    y_mag = _stft_magnitude(y2, fft_size, shift_size, win_length, window)
    frames, C = x_mag.shape[1], x_mag.shape[2]
    x3 = x_mag.reshape(CH, B * frames, C)
    y3 = y_mag.reshape(CH, B * frames, C)

    return _stft_magnitude_losses(
        x3, y3, n_cores=n_cores, target_block_bytes=target_block_bytes,
        vmem_limit_bytes=vmem_limit_bytes)


# ----------------------------------- demo -----------------------------------

if __name__ == "__main__":
    key = jax.random.PRNGKey(0)
    kx, ky = jax.random.split(key)

    # Small demo shapes: (B, channels, T) signals with a small STFT config.
    B, CH, T = 2, 2, 2048
    fft_size, hop_size, win_length = 256, 64, 128

    x = jax.random.normal(kx, (B, CH, T), dtype=jnp.float32)
    y = x + 0.1 * jax.random.normal(ky, (B, CH, T), dtype=jnp.float32)

    sc_loss, mag_loss = stft_loss(x, y, fft_size=fft_size, shift_size=hop_size,
                                  win_length=win_length)
    sc_loss, mag_loss = jax.block_until_ready((sc_loss, mag_loss))

    # Pure-JAX reference of both losses (same STFT front-end, per-channel form).
    window = _hann_window(win_length)
    sc_ref = jnp.float32(0.0)
    mag_ref = jnp.float32(0.0)
    for ch in range(CH):
        xm = _stft_magnitude(x[:, ch, :], fft_size, hop_size, win_length, window)
        ym = _stft_magnitude(y[:, ch, :], fft_size, hop_size, win_length, window)
        sc_ref += jnp.linalg.norm((ym - xm).ravel()) / jnp.linalg.norm(ym.ravel())
        mag_ref += jnp.mean(jnp.abs(jnp.log(ym) - jnp.log(xm)))

    assert jnp.allclose(sc_loss, sc_ref, rtol=5e-5, atol=1e-5), (sc_loss, sc_ref)
    assert jnp.allclose(mag_loss, mag_ref, rtol=5e-5, atol=1e-5), (mag_loss, mag_ref)

    # Extra check: tiny blocks + forced 2-way core split exercise the ragged-tail
    # masking, clamped duplicate-block skipping, and the chunked fori_loop path.
    sc_s, mag_s = stft_loss(x, y, fft_size=fft_size, shift_size=hop_size,
                            win_length=win_length, n_cores=2,
                            target_block_bytes=8 * 1024,
                            vmem_limit_bytes=32 * 1024 * 1024)
    sc_s, mag_s = jax.block_until_ready((sc_s, mag_s))
    assert jnp.allclose(sc_s, sc_ref, rtol=5e-5, atol=1e-5), (sc_s, sc_ref)
    assert jnp.allclose(mag_s, mag_ref, rtol=5e-5, atol=1e-5), (mag_s, mag_ref)

    print("KERNEL_OK")
</pallas_src>

<mosaic_0001>
module attributes {stable_mosaic.version = 11 : i64} {
  func.func @_losses_kernel(%arg0: i32, %arg1: i32, %arg2: i32, %arg3: memref<1x64x128xf32, #tpu.memory_space<vmem>>, %arg4: memref<1x64x128xf32, #tpu.memory_space<vmem>>, %arg5: memref<1x1x3x8x128xf32, #tpu.memory_space<vmem>>) attributes {dimension_semantics = [#tpu.dimension_semantics<parallel>, #tpu.dimension_semantics<arbitrary>, #tpu.dimension_semantics<arbitrary>], iteration_bounds = array<i64: 1, 2, 2>, scalar_prefetch = 0 : i64, scratch_operands = 0 : i64, tpu.core_type = #tpu.core_type<tc>, window_params = [{transform_indices = @transform_0, window_bounds = array<i64: 1, 64, 128>}, {transform_indices = @transform_1, window_bounds = array<i64: 1, 64, 128>}, {transform_indices = @transform_2, window_bounds = array<i64: 1, 1, 3, 8, 128>}]} {
    %c0_i32 = arith.constant 0 : i32
    %0 = arith.cmpi eq, %arg2, %c0_i32 : i32
    %1 = arith.extui %0 : i1 to i32
    %c0_i32_0 = arith.constant 0 : i32
    %2 = arith.cmpi ne, %1, %c0_i32_0 : i32
    scf.if %2 {
      %cst = arith.constant 0.000000e+00 : f32
      %11 = vector.broadcast %cst : f32 to vector<3x8x128xf32>
      %c0 = arith.constant 0 : index
      %c0_4 = arith.constant 0 : index
      %c0_5 = arith.constant 0 : index
      %c0_6 = arith.constant 0 : index
      %c0_7 = arith.constant 0 : index
      %12 = vector.load %arg5[%c0, %c0_4, %c0_5, %c0_6, %c0_7] : memref<1x1x3x8x128xf32, #tpu.memory_space<vmem>>, vector<1x1x3x8x128xf32>
      %13 = vector.shape_cast %12 : vector<1x1x3x8x128xf32> to vector<3x8x128xf32>
      %14 = vector.shape_cast %11 : vector<3x8x128xf32> to vector<1x1x3x8x128xf32>
      tpu.vector_store %arg5[%c0, %c0_4, %c0_5, %c0_6, %c0_7], %14 {strides = array<i32>} : memref<1x1x3x8x128xf32, #tpu.memory_space<vmem>>, vector<1x1x3x8x128xf32>,
    } else {
    }
    %c2_i32 = arith.constant 2 : i32
    %3 = arith.muli %arg0, %c2_i32 : i32
    %4 = arith.addi %3, %arg2 : i32
    %c1_i32 = arith.constant 1 : i32
    %5 = arith.cmpi eq, %4, %c1_i32 : i32
    %6 = arith.extui %5 : i1 to i32
    %c0_i32_1 = arith.constant 0 : i32
    %7 = arith.cmpi ne, %6, %c0_i32_1 : i32
    scf.if %7 {
      %cst = arith.constant 0.000000e+00 : f32
      %11 = vector.broadcast %cst : f32 to vector<8x128xf32>
      %c0_i32_4 = arith.constant 0 : i32
      %c8_i32 = arith.constant 8 : i32
      %12 = arith.addi %c0_i32_4, %c8_i32 : i32
      %c1_i32_5 = arith.constant 1 : i32
      %13:3 = scf.for %arg6 = %c0_i32_4 to %12 step %c1_i32_5 iter_args(%arg7 = %11, %arg8 = %11, %arg9 = %11) -> (vector<8x128xf32>, vector<8x128xf32>, vector<8x128xf32>)  : i32 {
        %c8_i32_34 = arith.constant 8 : i32
        %32 = arith.muli %arg6, %c8_i32_34 : i32
        %33 = tpu.assume_multiple %32, 8 : i32
        %c0_35 = arith.constant 0 : index
        %34 = arith.index_cast %33 : i32 to index
        %c0_36 = arith.constant 0 : index
        %35 = vector.load %arg3[%c0_35, %34, %c0_36] : memref<1x64x128xf32, #tpu.memory_space<vmem>>, vector<1x8x128xf32>
        %36 = vector.shape_cast %35 : vector<1x8x128xf32> to vector<8x128xf32>
        %c0_37 = arith.constant 0 : index
        %37 = arith.index_cast %33 : i32 to index
        %c0_38 = arith.constant 0 : index
        %38 = vector.load %arg4[%c0_37, %37, %c0_38] : memref<1x64x128xf32, #tpu.memory_space<vmem>>, vector<1x8x128xf32>
        %39 = vector.shape_cast %38 : vector<1x8x128xf32> to vector<8x128xf32>
        %40 = arith.subf %39, %36 : vector<8x128xf32>
        %41 = arith.mulf %40, %40 : vector<8x128xf32>
        %42 = arith.mulf %39, %39 : vector<8x128xf32>
        %43 = math.log %39 : vector<8x128xf32>
        %44 = math.log %36 : vector<8x128xf32>
        %45 = arith.subf %43, %44 : vector<8x128xf32>
        %46 = math.absf %45 : vector<8x128xf32>
        %47 = tpu.iota {dimensions = array<i32: 0>} : vector<8x1xi32>
        %c64_i32 = arith.constant 64 : i32
        %48 = arith.muli %4, %c64_i32 : i32
        %49 = arith.addi %48, %33 : i32
        %50 = vector.broadcast %49 : i32 to vector<8x1xi32>
        %51 = arith.addi %50, %47 : vector<8x1xi32>
        %c66_i32 = arith.constant 66 : i32
        %52 = vector.broadcast %c66_i32 : i32 to vector<8x1xi32>
        %53 = arith.cmpi slt, %51, %52 : vector<8x1xi32>
        %cst_39 = arith.constant 0.000000e+00 : f32
        %54 = vector.broadcast %cst_39 : f32 to vector<8x128xf32>
        %55 = vector.shape_cast %53 : vector<8x1xi1> to vector<8x1xi1>
        %56 = vector.broadcast %55 : vector<8x1xi1> to vector<8x128xi1>
        %57 = arith.select %56, %41, %54 : vector<8x128xi1>, vector<8x128xf32>
        %58 = vector.shape_cast %53 : vector<8x1xi1> to vector<8x1xi1>
        %59 = vector.broadcast %58 : vector<8x1xi1> to vector<8x128xi1>
        %60 = arith.select %59, %42, %54 : vector<8x128xi1>, vector<8x128xf32>
        %61 = vector.shape_cast %53 : vector<8x1xi1> to vector<8x1xi1>
        %62 = vector.broadcast %61 : vector<8x1xi1> to vector<8x128xi1>
        %63 = arith.select %62, %46, %54 : vector<8x128xi1>, vector<8x128xf32>
        %64 = arith.addf %arg7, %57 : vector<8x128xf32>
        %65 = arith.addf %arg8, %60 : vector<8x128xf32>
        %66 = arith.addf %arg9, %63 : vector<8x128xf32>
        scf.yield %64, %65, %66 : vector<8x128xf32>, vector<8x128xf32>, vector<8x128xf32>
      }
      %c8_i32_6 = arith.constant 8 : i32
      %c0 = arith.constant 0 : index
      %c0_7 = arith.constant 0 : index
      %c0_8 = arith.constant 0 : index
      %c0_9 = arith.constant 0 : index
      %c0_10 = arith.constant 0 : index
      %14 = vector.load %arg5[%c0, %c0_7, %c0_8, %c0_9, %c0_10] : memref<1x1x3x8x128xf32, #tpu.memory_space<vmem>>, vector<1x1x1x8x128xf32>
      %15 = vector.shape_cast %14 : vector<1x1x1x8x128xf32> to vector<8x128xf32>
      %16 = arith.addf %15, %13#0 : vector<8x128xf32>
      %c0_11 = arith.constant 0 : index
      %c0_12 = arith.constant 0 : index
      %c0_13 = arith.constant 0 : index
      %c0_14 = arith.constant 0 : index
      %c0_15 = arith.constant 0 : index
      %17 = vector.load %arg5[%c0_11, %c0_12, %c0_13, %c0_14, %c0_15] : memref<1x1x3x8x128xf32, #tpu.memory_space<vmem>>, vector<1x1x1x8x128xf32>
      %18 = vector.shape_cast %17 : vector<1x1x1x8x128xf32> to vector<8x128xf32>
      %19 = vector.shape_cast %16 : vector<8x128xf32> to vector<1x1x1x8x128xf32>
      tpu.vector_store %arg5[%c0_11, %c0_12, %c0_13, %c0_14, %c0_15], %19 {strides = array<i32>} : memref<1x1x3x8x128xf32, #tpu.memory_space<vmem>>, vector<1x1x1x8x128xf32>,
      %c0_16 = arith.constant 0 : index
      %c0_17 = arith.constant 0 : index
      %c1 = arith.constant 1 : index
      %c0_18 = arith.constant 0 : index
      %c0_19 = arith.constant 0 : index
      %20 = vector.load %arg5[%c0_16, %c0_17, %c1, %c0_18, %c0_19] : memref<1x1x3x8x128xf32, #tpu.memory_space<vmem>>, vector<1x1x1x8x128xf32>
      %21 = vector.shape_cast %20 : vector<1x1x1x8x128xf32> to vector<8x128xf32>
      %22 = arith.addf %21, %13#1 : vector<8x128xf32>
      %c0_20 = arith.constant 0 : index
      %c0_21 = arith.constant 0 : index
      %c1_22 = arith.constant 1 : index
      %c0_23 = arith.constant 0 : index
      %c0_24 = arith.constant 0 : index
      %23 = vector.load %arg5[%c0_20, %c0_21, %c1_22, %c0_23, %c0_24] : memref<1x1x3x8x128xf32, #tpu.memory_space<vmem>>, vector<1x1x1x8x128xf32>
      %24 = vector.shape_cast %23 : vector<1x1x1x8x128xf32> to vector<8x128xf32>
      %25 = vector.shape_cast %22 : vector<8x128xf32> to vector<1x1x1x8x128xf32>
      tpu.vector_store %arg5[%c0_20, %c0_21, %c1_22, %c0_23, %c0_24], %25 {strides = array<i32>} : memref<1x1x3x8x128xf32, #tpu.memory_space<vmem>>, vector<1x1x1x8x128xf32>,
      %c0_25 = arith.constant 0 : index
      %c0_26 = arith.constant 0 : index
      %c2 = arith.constant 2 : index
      %c0_27 = arith.constant 0 : index
      %c0_28 = arith.constant 0 : index
      %26 = vector.load %arg5[%c0_25, %c0_26, %c2, %c0_27, %c0_28] : memref<1x1x3x8x128xf32, #tpu.memory_space<vmem>>, vector<1x1x1x8x128xf32>
      %27 = vector.shape_cast %26 : vector<1x1x1x8x128xf32> to vector<8x128xf32>
      %28 = arith.addf %27, %13#2 : vector<8x128xf32>
      %c0_29 = arith.constant 0 : index
      %c0_30 = arith.constant 0 : index
      %c2_31 = arith.constant 2 : index
      %c0_32 = arith.constant 0 : index
      %c0_33 = arith.constant 0 : index
      %29 = vector.load %arg5[%c0_29, %c0_30, %c2_31, %c0_32, %c0_33] : memref<1x1x3x8x128xf32, #tpu.memory_space<vmem>>, vector<1x1x1x8x128xf32>
      %30 = vector.shape_cast %29 : vector<1x1x1x8x128xf32> to vector<8x128xf32>
      %31 = vector.shape_cast %28 : vector<8x128xf32> to vector<1x1x1x8x128xf32>
      tpu.vector_store %arg5[%c0_29, %c0_30, %c2_31, %c0_32, %c0_33], %31 {strides = array<i32>} : memref<1x1x3x8x128xf32, #tpu.memory_space<vmem>>, vector<1x1x1x8x128xf32>,
    } else {
    }
    %c1_i32_2 = arith.constant 1 : i32
    %8 = arith.cmpi slt, %4, %c1_i32_2 : i32
    %9 = arith.extui %8 : i1 to i32
    %c0_i32_3 = arith.constant 0 : i32
    %10 = arith.cmpi ne, %9, %c0_i32_3 : i32
    scf.if %10 {
      %cst = arith.constant 0.000000e+00 : f32
      %11 = vector.broadcast %cst : f32 to vector<8x128xf32>
      %c0_i32_4 = arith.constant 0 : i32
      %c8_i32 = arith.constant 8 : i32
      %12 = arith.addi %c0_i32_4, %c8_i32 : i32
      %c1_i32_5 = arith.constant 1 : i32
      %13:3 = scf.for %arg6 = %c0_i32_4 to %12 step %c1_i32_5 iter_args(%arg7 = %11, %arg8 = %11, %arg9 = %11) -> (vector<8x128xf32>, vector<8x128xf32>, vector<8x128xf32>)  : i32 {
        %c8_i32_34 = arith.constant 8 : i32
        %32 = arith.muli %arg6, %c8_i32_34 : i32
        %33 = tpu.assume_multiple %32, 8 : i32
        %c0_35 = arith.constant 0 : index
        %34 = arith.index_cast %33 : i32 to index
        %c0_36 = arith.constant 0 : index
        %35 = vector.load %arg3[%c0_35, %34, %c0_36] : memref<1x64x128xf32, #tpu.memory_space<vmem>>, vector<1x8x128xf32>
        %36 = vector.shape_cast %35 : vector<1x8x128xf32> to vector<8x128xf32>
        %c0_37 = arith.constant 0 : index
        %37 = arith.index_cast %33 : i32 to index
        %c0_38 = arith.constant 0 : index
        %38 = vector.load %arg4[%c0_37, %37, %c0_38] : memref<1x64x128xf32, #tpu.memory_space<vmem>>, vector<1x8x128xf32>
        %39 = vector.shape_cast %38 : vector<1x8x128xf32> to vector<8x128xf32>
        %40 = arith.subf %39, %36 : vector<8x128xf32>
        %41 = arith.mulf %40, %40 : vector<8x128xf32>
        %42 = arith.mulf %39, %39 : vector<8x128xf32>
        %43 = math.log %39 : vector<8x128xf32>
        %44 = math.log %36 : vector<8x128xf32>
        %45 = arith.subf %43, %44 : vector<8x128xf32>
        %46 = math.absf %45 : vector<8x128xf32>
        %47 = arith.addf %arg7, %41 : vector<8x128xf32>
        %48 = arith.addf %arg8, %42 : vector<8x128xf32>
        %49 = arith.addf %arg9, %46 : vector<8x128xf32>
        scf.yield %47, %48, %49 : vector<8x128xf32>, vector<8x128xf32>, vector<8x128xf32>
      }
      %c8_i32_6 = arith.constant 8 : i32
      %c0 = arith.constant 0 : index
      %c0_7 = arith.constant 0 : index
      %c0_8 = arith.constant 0 : index
      %c0_9 = arith.constant 0 : index
      %c0_10 = arith.constant 0 : index
      %14 = vector.load %arg5[%c0, %c0_7, %c0_8, %c0_9, %c0_10] : memref<1x1x3x8x128xf32, #tpu.memory_space<vmem>>, vector<1x1x1x8x128xf32>
      %15 = vector.shape_cast %14 : vector<1x1x1x8x128xf32> to vector<8x128xf32>
      %16 = arith.addf %15, %13#0 : vector<8x128xf32>
      %c0_11 = arith.constant 0 : index
      %c0_12 = arith.constant 0 : index
      %c0_13 = arith.constant 0 : index
      %c0_14 = arith.constant 0 : index
      %c0_15 = arith.constant 0 : index
      %17 = vector.load %arg5[%c0_11, %c0_12, %c0_13, %c0_14, %c0_15] : memref<1x1x3x8x128xf32, #tpu.memory_space<vmem>>, vector<1x1x1x8x128xf32>
      %18 = vector.shape_cast %17 : vector<1x1x1x8x128xf32> to vector<8x128xf32>
      %19 = vector.shape_cast %16 : vector<8x128xf32> to vector<1x1x1x8x128xf32>
      tpu.vector_store %arg5[%c0_11, %c0_12, %c0_13, %c0_14, %c0_15], %19 {strides = array<i32>} : memref<1x1x3x8x128xf32, #tpu.memory_space<vmem>>, vector<1x1x1x8x128xf32>,
      %c0_16 = arith.constant 0 : index
      %c0_17 = arith.constant 0 : index
      %c1 = arith.constant 1 : index
      %c0_18 = arith.constant 0 : index
      %c0_19 = arith.constant 0 : index
      %20 = vector.load %arg5[%c0_16, %c0_17, %c1, %c0_18, %c0_19] : memref<1x1x3x8x128xf32, #tpu.memory_space<vmem>>, vector<1x1x1x8x128xf32>
      %21 = vector.shape_cast %20 : vector<1x1x1x8x128xf32> to vector<8x128xf32>
      %22 = arith.addf %21, %13#1 : vector<8x128xf32>
      %c0_20 = arith.constant 0 : index
      %c0_21 = arith.constant 0 : index
      %c1_22 = arith.constant 1 : index
      %c0_23 = arith.constant 0 : index
      %c0_24 = arith.constant 0 : index
      %23 = vector.load %arg5[%c0_20, %c0_21, %c1_22, %c0_23, %c0_24] : memref<1x1x3x8x128xf32, #tpu.memory_space<vmem>>, vector<1x1x1x8x128xf32>
      %24 = vector.shape_cast %23 : vector<1x1x1x8x128xf32> to vector<8x128xf32>
      %25 = vector.shape_cast %22 : vector<8x128xf32> to vector<1x1x1x8x128xf32>
      tpu.vector_store %arg5[%c0_20, %c0_21, %c1_22, %c0_23, %c0_24], %25 {strides = array<i32>} : memref<1x1x3x8x128xf32, #tpu.memory_space<vmem>>, vector<1x1x1x8x128xf32>,
      %c0_25 = arith.constant 0 : index
      %c0_26 = arith.constant 0 : index
      %c2 = arith.constant 2 : index
      %c0_27 = arith.constant 0 : index
      %c0_28 = arith.constant 0 : index
      %26 = vector.load %arg5[%c0_25, %c0_26, %c2, %c0_27, %c0_28] : memref<1x1x3x8x128xf32, #tpu.memory_space<vmem>>, vector<1x1x1x8x128xf32>
      %27 = vector.shape_cast %26 : vector<1x1x1x8x128xf32> to vector<8x128xf32>
      %28 = arith.addf %27, %13#2 : vector<8x128xf32>
      %c0_29 = arith.constant 0 : index
      %c0_30 = arith.constant 0 : index
      %c2_31 = arith.constant 2 : index
      %c0_32 = arith.constant 0 : index
      %c0_33 = arith.constant 0 : index
      %29 = vector.load %arg5[%c0_29, %c0_30, %c2_31, %c0_32, %c0_33] : memref<1x1x3x8x128xf32, #tpu.memory_space<vmem>>, vector<1x1x1x8x128xf32>
      %30 = vector.shape_cast %29 : vector<1x1x1x8x128xf32> to vector<8x128xf32>
      %31 = vector.shape_cast %28 : vector<8x128xf32> to vector<1x1x1x8x128xf32>
      tpu.vector_store %arg5[%c0_29, %c0_30, %c2_31, %c0_32, %c0_33], %31 {strides = array<i32>} : memref<1x1x3x8x128xf32, #tpu.memory_space<vmem>>, vector<1x1x1x8x128xf32>,
    } else {
    }
    return
  }
  func.func @transform_0(%arg0: i32, %arg1: i32, %arg2: i32) -> (i32, i32, i32) {
    %c2_i32 = arith.constant 2 : i32
    %0 = arith.muli %arg0, %c2_i32 : i32
    %1 = arith.addi %0, %arg2 : i32
    %c0_i32 = arith.constant 0 : i32
    %c0_i32_0 = arith.constant 0 : i32
    return %arg1, %1, %c0_i32 : i32, i32, i32
  }
  func.func @transform_1(%arg0: i32, %arg1: i32, %arg2: i32) -> (i32, i32, i32) {
    %c2_i32 = arith.constant 2 : i32
    %0 = arith.muli %arg0, %c2_i32 : i32
    %1 = arith.addi %0, %arg2 : i32
    %c0_i32 = arith.constant 0 : i32
    %c0_i32_0 = arith.constant 0 : i32
    return %arg1, %1, %c0_i32 : i32, i32, i32
  }
  func.func @transform_2(%arg0: i32, %arg1: i32, %arg2: i32) -> (i32, i32, i32, i32, i32) {
    %c0_i32 = arith.constant 0 : i32
    %c0_i32_0 = arith.constant 0 : i32
    %c0_i32_1 = arith.constant 0 : i32
    %c0_i32_2 = arith.constant 0 : i32
    return %arg0, %arg1, %c0_i32, %c0_i32_0, %c0_i32_1 : i32, i32, i32, i32, i32
  }
}

</mosaic_0001>

<llo_original>
// kernel: tpu_custom_call.1
$region0: #{tpu_custom_call.1}
  #allocation0 [shape = 'u32[]', space=smem, size = 0x4, offset = 0x4, fixed_abs, tag = 'smem constant byte address 0x4 - core index']
  #allocation1 [shape = 'u32[144,128]{1,0:T(1,128)}', space=vmem, size = 0x12000, scoped, tag = 'internal scratch']
  %s0 = inlined_call_operand.hbm [shape: f32[2,66,129], index: 0, kind: input, shape index: {}]
  %s1 = inlined_call_operand.hbm [shape: f32[2,66,129], index: 1, kind: input, shape index: {}]
  %s2 = inlined_call_operand.hbm [shape: f32[1,2,3,8,128], index: 2, kind: output, shape index: {}]
  %s3 = sld [smem:[#allocation0]]
  $region75: #{tpu_custom_call.1} parent=0
    _
  %s5 = ssub.s32 1, %s3
  %s6 = scalar_select 0, %s5, %s3
  $region1: #{tpu_custom_call.1} parent=0
    #allocation2 [shape = 'u8[65536]{0}', space=vmem, size = 0x10000, scoped, tag = 'input window, operand 0']
    #allocation3 [shape = 's32[2]{0}', space=sflag, size = 0x8, scoped, tag = 'scoped memory for tpu_custom_call.1']
    #allocation4 [shape = 's32[2]{0}', space=sflag, size = 0x8, scoped, tag = 'scoped memory for tpu_custom_call.1']
    #allocation5 [shape = 'u8[65536]{0}', space=vmem, size = 0x10000, scoped, tag = 'input window, operand 1']
    #allocation6 [shape = 's32[2]{0}', space=sflag, size = 0x8, scoped, tag = 'scoped memory for tpu_custom_call.1']
    #allocation7 [shape = 'u8[24576]{0}', space=vmem, size = 0x6000, scoped, tag = 'output window, operand 0']
    %7 = vsyncpa [#allocation3], 0
    %s8 = scalar_lea.sflag [#allocation3], 1
    %9 = vsyncpa %s8, 0
    %10 = vsyncpa [#allocation6], 0
    %s11 = scalar_lea.sflag [#allocation6], 1
    %12 = vsyncpa %s11, 0
    %13 = vsyncpa [#allocation4], 0
    %s14 = scalar_lea.sflag [#allocation4], 1
    %15 = vsyncpa %s14, 0
    loop: start=0, step=1, limit=6
    $region2: #{tpu_custom_call.1} parent=1 // loop_pre_header
      _
    $region3: #{tpu_custom_call.1} parent=1 // loop_header
      %s17 = sphi 0, %s21
      %p18 = scmp.ge.s32.totalorder %s17, 6
      %s24 = sphi 0, %s43
      %s25 = sphi 0, %s39
      %s26 = sphi 0, %s35
      %s27 = sphi 0, %s24
      %s28 = sphi 0, %s25
      %s29 = sphi 0, %s26
      %s30 = sphi 0, %s27
      %s31 = sphi 0, %s28
      %s32 = sphi 0, %s29
      %s52 = sphi 0, %s54
      %s55 = sphi 0, %s52
      %s56 = sphi 0, %s55
      %s72 = sphi 0, %s56
      %s84 = sphi 0, %s86
      %s87 = sphi 0, %s84
      %s88 = sphi 0, %s87
      %s104 = sphi 0, %s88
      %s112 = sphi 0, %s114
      %s115 = sphi 0, %s112
      %s116 = sphi 0, %s115
      %s132 = sphi 0, %s116
    $region4: #{tpu_custom_call.1} parent=1 // loop_header_branch
      %20 = sbr.rel (%p18) target = $region8
    $region5: #{tpu_custom_call.1} parent=1 // loop_body
      %s22 = ssub.s32 %s17, 1
      %s23 = ssub.s32 %s17, 2
      %s33 = sadd.s32 1, %s26
      %p34 = scmp.ge.s32.totalorder %s33, 2
      %s35 = scalar_select %p34, 0, %s33
      %s36 = sadd.s32 1, %s25
      %s37 = scalar_select %p34, %s36, %s25
      %p38 = scmp.ge.s32.totalorder %s37, 2
      %s39 = scalar_select %p38, 0, %s37
      %s40 = sadd.s32 1, %s24
      %s41 = scalar_select %p38, %s40, %s24
      %p42 = scmp.ge.s32.totalorder %s41, 1
      %s43 = scalar_select %p42, 0, %s41
      %s44 = smul.u32 %s24, 2
      %s45 = sadd.s32 %s44, %s26
      %s46 = smul.u32 %s43, 2
      %s47 = sadd.s32 %s46, %s35
      %s48 = ssub.s32 %s25, %s39
      %s49 = ssub.s32 %s45, %s47
      %s50 = sor.u32 %s48, %s49
      %p51 = scmp.eq.s32.totalorder %s50, 0
      %s53 = sadd.s32 %s52, 1
      %s54 = scalar_select %p51, %s52, %s53
      %p57 = pneg %p51
      %p58 = scmp.eq.s32.totalorder %s17, 3
      %p59 = por %p57, %p58
      %p60 = scmp.ne.s32.totalorder %s52, %s55
      %p61 = scmp.eq.s32.totalorder %s17, 0
      %p62 = por %p60, %p61
      %p63 = scmp.ne.s32.totalorder %s52, %s55
      %p64 = scmp.eq.s32.totalorder %s22, 3
      %p65 = por %p63, %p64
      %p66 = scmp.ne.s32.totalorder %s55, %s56
      %p67 = scmp.eq.s32.totalorder %s22, 0
      %p68 = por %p66, %p67
      %p69 = scmp.ne.s32.totalorder %s55, %s56
      %p70 = scmp.eq.s32.totalorder %s23, 3
      %p71 = por %p69, %p70
      %p73 = scmp.ne.s32.totalorder %s56, %s72
      %p74 = scmp.eq.s32.totalorder %s23, 0
      %p75 = por %p73, %p74
      %s76 = smul.u32 %s24, 2
      %s77 = sadd.s32 %s76, %s26
      %s78 = smul.u32 %s43, 2
      %s79 = sadd.s32 %s78, %s35
      %s80 = ssub.s32 %s25, %s39
      %s81 = ssub.s32 %s77, %s79
      %s82 = sor.u32 %s80, %s81
      %p83 = scmp.eq.s32.totalorder %s82, 0
      %s85 = sadd.s32 %s84, 1
      %s86 = scalar_select %p83, %s84, %s85
      %p89 = pneg %p83
      %p90 = scmp.eq.s32.totalorder %s17, 3
      %p91 = por %p89, %p90
      %p92 = scmp.ne.s32.totalorder %s84, %s87
      %p93 = scmp.eq.s32.totalorder %s17, 0
      %p94 = por %p92, %p93
      %p95 = scmp.ne.s32.totalorder %s84, %s87
      %p96 = scmp.eq.s32.totalorder %s22, 3
      %p97 = por %p95, %p96
      %p98 = scmp.ne.s32.totalorder %s87, %s88
      %p99 = scmp.eq.s32.totalorder %s22, 0
      %p100 = por %p98, %p99
      %p101 = scmp.ne.s32.totalorder %s87, %s88
      %p102 = scmp.eq.s32.totalorder %s23, 3
      %p103 = por %p101, %p102
      %p105 = scmp.ne.s32.totalorder %s88, %s104
      %p106 = scmp.eq.s32.totalorder %s23, 0
      %p107 = por %p105, %p106
      %s108 = ssub.s32 %s24, %s43
      %s109 = ssub.s32 %s25, %s39
      %s110 = sor.u32 %s108, %s109
      %p111 = scmp.eq.s32.totalorder %s110, 0
      %s113 = sadd.s32 %s112, 1
      %s114 = scalar_select %p111, %s112, %s113
      %p117 = pneg %p111
      %p118 = scmp.eq.s32.totalorder %s17, 3
      %p119 = por %p117, %p118
      %p120 = scmp.ne.s32.totalorder %s112, %s115
      %p121 = scmp.eq.s32.totalorder %s17, 0
      %p122 = por %p120, %p121
      %p123 = scmp.ne.s32.totalorder %s112, %s115
      %p124 = scmp.eq.s32.totalorder %s22, 3
      %p125 = por %p123, %p124
      %p126 = scmp.ne.s32.totalorder %s115, %s116
      %p127 = scmp.eq.s32.totalorder %s22, 0
      %p128 = por %p126, %p127
      %p129 = scmp.ne.s32.totalorder %s115, %s116
      %p130 = scmp.eq.s32.totalorder %s23, 3
      %p131 = por %p129, %p130
      %p133 = scmp.ne.s32.totalorder %s116, %s132
      %p134 = scmp.eq.s32.totalorder %s23, 0
      %p135 = por %p133, %p134
      %p136 = scmp.le.s32.totalorder 1, %s17
      %p137 = scmp.lt.s32.totalorder %s17, 5
      %p138 = pnand %p136, %p137
      %p139 = pneg %p138
      // Predicated region
      $region9: #{tpu_custom_call.1} parent=5 // pred_check
        _
      $region10: #{tpu_custom_call.1} parent=5 // pred_check_branch
        %141 = sbr.rel (%p138) target = $region12
      $region11: #{tpu_custom_call.1} parent=5 // pred_region
        %s142 = ssub.s32 %s17, 1
      $region12: #{tpu_custom_call.1} parent=5 // pred_fallthru
        _
      %p143 = scmp.lt.s32.totalorder %s17, 4
      // Predicated region
      $region13: #{tpu_custom_call.1} parent=5 // pred_check
        %p144 = pneg %p143
      $region14: #{tpu_custom_call.1} parent=5 // pred_check_branch
        %146 = sbr.rel (%p144) target = $region16
      $region15: #{tpu_custom_call.1} parent=5 // pred_region
        // Predicated region
        $region17: #{tpu_custom_call.1} parent=15 // pred_check
          %p147 = pneg %p62
        $region18: #{tpu_custom_call.1} parent=15 // pred_check_branch
          %149 = sbr.rel (%p147) target = $region20
        $region19: #{tpu_custom_call.1} parent=15 // pred_region
          %s150 = sand.u32 %s52, 1
          %s151 = scalar_lea.sflag [#allocation3], %s150
          %s152 = sand.u32 %s52, 1
          %s153 = smul.addr %s152, 64
          %s154 = scalar_lea.vmem [#allocation2], %s153
          %s155 = smul.u32 %s24, 2
          %s156 = sadd.s32 %s155, %s26
          %s157 = smul.u32 8, %s156
          %s158 = ssub.s32 9, %s157
          %p159 = scmp.lt.s32.totalorder %s158, 8
          %s160 = scalar_select %p159, %s158, 8
          %s161 = smul.u32 128, %s160
          %s163 = ssub.s32 1024, %s161
          %164 = vsyncadd %s151, %s163
          %p165 = scmp.ne.s32.totalorder 0, %s161
          %s166 = smul.addr %s157, 2
          %s167 = smul.addr %s25, 18
          %s168 = sadd.s32 %s166, %s167
          %s169 = smul.addr %s168, 128
          %s170 = scalar_lea.hbm %s0, %s169
          %s171 = smul.u32 8, %s160
          %s172 = sshll.u32 %s154, 4
          %s173 = int_to_ptr.vmem [resolvable:$true] %s172
          %s174 = sshll.u32 %s171, 4
          %178 = dma.hbm_to_vmem [thread:$0]  (%p165), %s170, %s174, %s173, %s151, 256, 128, 8
        $region20: #{tpu_custom_call.1} parent=15 // pred_fallthru
          _
        // Predicated region
        $region21: #{tpu_custom_call.1} parent=15 // pred_check
          %p179 = pneg %p94
        $region22: #{tpu_custom_call.1} parent=15 // pred_check_branch
          %181 = sbr.rel (%p179) target = $region24
        $region23: #{tpu_custom_call.1} parent=15 // pred_region
          %s182 = sand.u32 %s84, 1
          %s183 = scalar_lea.sflag [#allocation6], %s182
          %s184 = sand.u32 %s84, 1
          %s185 = smul.addr %s184, 64
          %s186 = scalar_lea.vmem [#allocation5], %s185
          %s187 = smul.u32 %s24, 2
          %s188 = sadd.s32 %s187, %s26
          %s189 = smul.u32 8, %s188
          %s190 = ssub.s32 9, %s189
          %p191 = scmp.lt.s32.totalorder %s190, 8
          %s192 = scalar_select %p191, %s190, 8
          %s193 = smul.u32 128, %s192
          %s195 = ssub.s32 1024, %s193
          %196 = vsyncadd %s183, %s195
          %p197 = scmp.ne.s32.totalorder 0, %s193
          %s198 = smul.addr %s189, 2
          %s199 = smul.addr %s25, 18
          %s200 = sadd.s32 %s198, %s199
          %s201 = smul.addr %s200, 128
          %s202 = scalar_lea.hbm %s1, %s201
          %s203 = smul.u32 8, %s192
          %s204 = sshll.u32 %s186, 4
          %s205 = int_to_ptr.vmem [resolvable:$true] %s204
          %s206 = sshll.u32 %s203, 4
          %210 = dma.hbm_to_vmem [thread:$0]  (%p197), %s202, %s206, %s205, %s183, 256, 128, 8
        $region24: #{tpu_custom_call.1} parent=15 // pred_fallthru
          _
      $region16: #{tpu_custom_call.1} parent=5 // pred_fallthru
        _
      %p211 = scmp.le.s32.totalorder 1, %s17
      %p212 = scmp.lt.s32.totalorder %s17, 5
      %p213 = pnand %p211, %p212
      %p214 = pneg %p213
      // Predicated region
      $region25: #{tpu_custom_call.1} parent=5 // pred_check
        _
      $region26: #{tpu_custom_call.1} parent=5 // pred_check_branch
        %216 = sbr.rel (%p213) target = $region28
      $region27: #{tpu_custom_call.1} parent=5 // pred_region
        %s217 = ssub.s32 %s17, 1
        %s218 = sand.u32 %s55, 1
        %s219 = scalar_lea.sflag [#allocation3], %s218
        %s220 = sand.u32 %s55, 1
        %s221 = smul.addr %s220, 64
        %s222 = scalar_lea.vmem [#allocation2], %s221
        // Predicated region
        $region29: #{tpu_custom_call.1} parent=27 // pred_check
          %p223 = pneg %p68
        $region30: #{tpu_custom_call.1} parent=27 // pred_check_branch
          %225 = sbr.rel (%p223) target = $region32
        $region31: #{tpu_custom_call.1} parent=27 // pred_region
          %226 = dma.done %s219, 1024
        $region32: #{tpu_custom_call.1} parent=27 // pred_fallthru
          _
        %s227 = sand.u32 %s87, 1
        %s228 = scalar_lea.sflag [#allocation6], %s227
        %s229 = sand.u32 %s87, 1
        %s230 = smul.addr %s229, 64
        %s231 = scalar_lea.vmem [#allocation5], %s230
        // Predicated region
        $region33: #{tpu_custom_call.1} parent=27 // pred_check
          %p232 = pneg %p100
        $region34: #{tpu_custom_call.1} parent=27 // pred_check_branch
          %234 = sbr.rel (%p232) target = $region36
        $region35: #{tpu_custom_call.1} parent=27 // pred_region
          %235 = dma.done %s228, 1024
        $region36: #{tpu_custom_call.1} parent=27 // pred_fallthru
          _
        %s236 = sand.u32 %s55, 1
        %s237 = scalar_lea.sflag [#allocation3], %s236
        %s238 = sand.u32 %s55, 1
        %s239 = smul.addr %s238, 64
        %s240 = scalar_lea.vmem [#allocation2], %s239
        %p241 = pneg %p68
        %p242 = pneg %p65
        %s243 = sand.u32 %s87, 1
        %s244 = scalar_lea.sflag [#allocation6], %s243
        %s245 = sand.u32 %s87, 1
        %s246 = smul.addr %s245, 64
        %s247 = scalar_lea.vmem [#allocation5], %s246
        %p248 = pneg %p100
        %p249 = pneg %p97
        %p250 = pneg %p128
        %p251 = pneg %p125
        %s252 = sand.u32 %s115, 1
        %s253 = scalar_lea.sflag [#allocation4], %s252
        %s254 = sand.u32 %s115, 1
        %s255 = smul.addr %s254, 24
        %s256 = scalar_lea.vmem [#allocation7], %s255
        %s257 = smul.u32 %s27, 2
        %s258 = sadd.s32 %s257, %s29
        %s259 = smul.u32 8, %s258
        %s260 = ssub.s32 9, %s259
        %p261 = scmp.lt.s32.totalorder %s260, 8
        %s262 = scalar_select %p261, %s260, 8
        %s263 = smul.u32 128, %s262
        %s264 = smul.u32 %s27, 2
        %s265 = sadd.s32 %s264, %s29
        %s266 = smul.u32 8, %s265
        %s267 = ssub.s32 9, %s266
        %p268 = scmp.lt.s32.totalorder %s267, 8
        %s269 = scalar_select %p268, %s267, 8
        %s270 = smul.u32 128, %s269
        %p271 = scmp.eq.s32.totalorder %s29, 0
        // Predicated region
        $region37: #{tpu_custom_call.1} parent=27 // pred_check
          %p272 = pneg %p271
        $region38: #{tpu_custom_call.1} parent=27 // pred_check_branch
          %274 = sbr.rel (%p272) target = $region40
        $region39: #{tpu_custom_call.1} parent=27 // pred_region
          %275 = vst [vmem:[%s256] sm:$0xff] 0.0
          %276 = vst [vmem:[%s256 + $0x8] sm:$0xff] 0.0
          %277 = vst [vmem:[%s256 + $0x10] sm:$0xff] 0.0
        $region40: #{tpu_custom_call.1} parent=27 // pred_fallthru
          _
        %s278 = smul.u32 %s27, 2
        %s279 = sadd.s32 %s278, %s29
        %p280 = scmp.eq.s32.totalorder %s279, 1
        // Predicated region
        $region41: #{tpu_custom_call.1} parent=27 // pred_check
          %p281 = pneg %p280
        $region42: #{tpu_custom_call.1} parent=27 // pred_check_branch
          %283 = sbr.rel (%p281) target = $region44
        $region43: #{tpu_custom_call.1} parent=27 // pred_region
          loop: start=0, step=1, limit=8
          $region45: #{tpu_custom_call.1} parent=43 // loop_pre_header
            _
          $region46: #{tpu_custom_call.1} parent=43 // loop_header
            %s285 = sphi 0, %s289
            %p286 = scmp.ge.s32.totalorder %s285, 8
            %v290 = vphi 0.0, %v319
            %v291 = vphi 0.0, %v320
            %v292 = vphi 0.0, %v321
          $region47: #{tpu_custom_call.1} parent=43 // loop_header_branch
            %288 = sbr.rel (%p286) target = $region51
          $region48: #{tpu_custom_call.1} parent=43 // loop_body
            %s293 = smul.u32 %s285, 8
            %s294 = scalar_lea.vmem %s222, %s293 [#allocation2]
            %v295 = vld [vmem:[%s294] sm:$0xff]
            %s296 = scalar_lea.vmem %s231, %s293 [#allocation5]
            %v297 = vld [vmem:[%s296] sm:$0xff]
            %v298 = vsub.f32 %v297, %v295
            %v299 = vmul.f32 %v298, %v298
            %v300 = vmul.f32 %v297, %v297
            %v301 = vlog2.pop %v297
            %v302 = vmul.f32 %v301, 0.6931472
            %v303 = vlog2.pop %v295
            %v304 = vmul.f32 %v303, 0.6931472
            %v305 = vsub.f32 %v302, %v304
            %v306 = vand.u32 2147483647, %v305
            %v307 = vlaneseq
            %v308 = vshrl.u32 %v307, 7
            %s309 = smul.u32 %s279, 64
            %s310 = sadd.s32 %s309, %s293
            %v311 = vstv %s310
            %v312 = vadd.s32 %v311, %v308
            %vm313 = vcmp.lt.s32.totalorder %v312, 66
            %v314 = vsel %vm313, 1, 0
            %vm315 = vcmp.eq.s32.totalorder %v314, 1
            %v316 = vsel %vm315, %v299, 0.0
            %v317 = vsel %vm315, %v300, 0.0
            %v318 = vsel %vm315, %v306, 0.0
            %v319 = vadd.f32 %v290, %v316
            %v320 = vadd.f32 %v291, %v317
            %v321 = vadd.f32 %v292, %v318
          $region49: #{tpu_custom_call.1} parent=43 // loop_footer
            %s289 = sadd.s32 1, %s285
          $region50: #{tpu_custom_call.1} parent=43 // loop_footer_branch
            %284 = sbr.rel target = $region46
          $region51: #{tpu_custom_call.1} parent=43 // loop_exit
            _
          %v322 = vld [vmem:[%s256] sm:$0xff]
          %v323 = vadd.f32 %v322, %v290
          %324 = vst [vmem:[%s256] sm:$0xff] %v323
          %s325 = scalar_lea.vmem %s256, 8 [#allocation7]
          %v326 = vld [vmem:[%s325] sm:$0xff]
          %v327 = vadd.f32 %v326, %v291
          %328 = vst [vmem:[%s325] sm:$0xff] %v327
          %s329 = scalar_lea.vmem %s256, 16 [#allocation7]
          %v330 = vld [vmem:[%s329] sm:$0xff]
          %v331 = vadd.f32 %v330, %v292
          %332 = vst [vmem:[%s329] sm:$0xff] %v331
        $region44: #{tpu_custom_call.1} parent=27 // pred_fallthru
          _
        %p333 = scmp.lt.s32.totalorder %s279, 1
        // Predicated region
        $region52: #{tpu_custom_call.1} parent=27 // pred_check
          %p334 = pneg %p333
        $region53: #{tpu_custom_call.1} parent=27 // pred_check_branch
          %336 = sbr.rel (%p334) target = $region55
        $region54: #{tpu_custom_call.1} parent=27 // pred_region
          loop: start=0, step=1, limit=8
          $region56: #{tpu_custom_call.1} parent=54 // loop_pre_header
            _
          $region57: #{tpu_custom_call.1} parent=54 // loop_header
            %s338 = sphi 0, %s342
            %p339 = scmp.ge.s32.totalorder %s338, 8
            %v343 = vphi 0.0, %v360
            %v344 = vphi 0.0, %v361
            %v345 = vphi 0.0, %v362
          $region58: #{tpu_custom_call.1} parent=54 // loop_header_branch
            %341 = sbr.rel (%p339) target = $region62
          $region59: #{tpu_custom_call.1} parent=54 // loop_body
            %s346 = smul.u32 %s338, 8
            %s347 = scalar_lea.vmem %s222, %s346 [#allocation2]
            %v348 = vld [vmem:[%s347] sm:$0xff]
            %s349 = scalar_lea.vmem %s231, %s346 [#allocation5]
            %v350 = vld [vmem:[%s349] sm:$0xff]
            %v351 = vsub.f32 %v350, %v348
            %v352 = vmul.f32 %v351, %v351
            %v353 = vmul.f32 %v350, %v350
            %v354 = vlog2.pop %v350
            %v355 = vmul.f32 %v354, 0.6931472
            %v356 = vlog2.pop %v348
            %v357 = vmul.f32 %v356, 0.6931472
            %v358 = vsub.f32 %v355, %v357
            %v359 = vand.u32 2147483647, %v358
            %v360 = vadd.f32 %v343, %v352
            %v361 = vadd.f32 %v344, %v353
            %v362 = vadd.f32 %v345, %v359
          $region60: #{tpu_custom_call.1} parent=54 // loop_footer
            %s342 = sadd.s32 1, %s338
          $region61: #{tpu_custom_call.1} parent=54 // loop_footer_branch
            %337 = sbr.rel target = $region57
          $region62: #{tpu_custom_call.1} parent=54 // loop_exit
            _
          %v363 = vld [vmem:[%s256] sm:$0xff]
          %v364 = vadd.f32 %v363, %v343
          %365 = vst [vmem:[%s256] sm:$0xff] %v364
          %s366 = scalar_lea.vmem %s256, 8 [#allocation7]
          %v367 = vld [vmem:[%s366] sm:$0xff]
          %v368 = vadd.f32 %v367, %v344
          %369 = vst [vmem:[%s366] sm:$0xff] %v368
          %s370 = scalar_lea.vmem %s256, 16 [#allocation7]
          %v371 = vld [vmem:[%s370] sm:$0xff]
          %v372 = vadd.f32 %v371, %v345
          %373 = vst [vmem:[%s370] sm:$0xff] %v372
        $region55: #{tpu_custom_call.1} parent=27 // pred_fallthru
          _
        %s374 = sand.u32 %s115, 1
        %s375 = scalar_lea.sflag [#allocation4], %s374
        %s376 = sand.u32 %s115, 1
        %s377 = smul.addr %s376, 24
        %s378 = scalar_lea.vmem [#allocation7], %s377
        // Predicated region
        $region63: #{tpu_custom_call.1} parent=27 // pred_check
          %p379 = pneg %p125
        $region64: #{tpu_custom_call.1} parent=27 // pred_check_branch
          %381 = sbr.rel (%p379) target = $region66
        $region65: #{tpu_custom_call.1} parent=27 // pred_region
          %s383 = ssub.s32 384, 384
          %384 = vsyncadd %s375, %s383
          %s385 = smul.addr %s28, 3
          %s386 = smul.addr %s27, 6
          %s387 = sadd.s32 %s385, %s386
          %s388 = smul.addr %s387, 128
          %s389 = scalar_lea.hbm %s2, %s388
          %s390 = sshll.u32 %s378, 4
          %s391 = int_to_ptr.vmem [resolvable:$true] %s390
          %396 = dma.vmem_to_hbm [thread:$0]  %s391, 384, %s389, %s375, 128, 128, 8
        $region66: #{tpu_custom_call.1} parent=27 // pred_fallthru
          _
      $region28: #{tpu_custom_call.1} parent=5 // pred_fallthru
        _
      %p397 = scmp.le.s32.totalorder 2, %s17
      // Predicated region
      $region67: #{tpu_custom_call.1} parent=5 // pred_check
        %p398 = pneg %p397
      $region68: #{tpu_custom_call.1} parent=5 // pred_check_branch
        %400 = sbr.rel (%p398) target = $region70
      $region69: #{tpu_custom_call.1} parent=5 // pred_region
        %s401 = ssub.s32 %s17, 2
        // Predicated region
        $region71: #{tpu_custom_call.1} parent=69 // pred_check
          %p402 = pneg %p131
        $region72: #{tpu_custom_call.1} parent=69 // pred_check_branch
          %404 = sbr.rel (%p402) target = $region74
        $region73: #{tpu_custom_call.1} parent=69 // pred_region
          %s405 = sand.u32 %s116, 1
          %s406 = scalar_lea.sflag [#allocation4], %s405
          %s407 = sand.u32 %s116, 1
          %s408 = smul.addr %s407, 24
          %s409 = scalar_lea.vmem [#allocation7], %s408
          %410 = dma.done %s406, 384
        $region74: #{tpu_custom_call.1} parent=69 // pred_fallthru
          _
      $region70: #{tpu_custom_call.1} parent=5 // pred_fallthru
        _
    $region6: #{tpu_custom_call.1} parent=1 // loop_footer
      %s21 = sadd.s32 1, %s17
    $region7: #{tpu_custom_call.1} parent=1 // loop_footer_branch
      %16 = sbr.rel target = $region3
    $region8: #{tpu_custom_call.1} parent=1 // loop_exit
      _
    %411 = vsyncpa [#allocation3], 1
    %s412 = scalar_lea.sflag [#allocation3], 1
    %413 = vsyncpa %s412, 1
    %414 = vsyncpa [#allocation6], 1
    %s415 = scalar_lea.sflag [#allocation6], 1
    %416 = vsyncpa %s415, 1
    %417 = vsyncpa [#allocation4], 1
    %s418 = scalar_lea.sflag [#allocation4], 1
    %419 = vsyncpa %s418, 1

</llo_original>
